<compile_context>
chip_gen: v7x
topology: tpu7x:2x2x1
jax: 0.10.0
libtpu: 0.0.40
codegen_flags: <defaults>
</compile_context>

<pallas_src>
import jax
import jax.numpy as jnp
from jax.experimental import pallas as pl
from jax.experimental.pallas import tpu as pltpu


def uv_matmul_kernel(u_ref, vt_ref, o_ref):
    # u_ref : (TM, K) tile of U
    # vt_ref: (K, TN) tile (or the whole) of V^T  -- already lane-dense on N
    # o_ref : (TM, TN) tile of X_pred = U @ V^T
    o_ref[...] = jnp.dot(
        u_ref[...], vt_ref[...], preferred_element_type=jnp.float32
    ).astype(o_ref.dtype)


def _roundup(x, m):
    return ((x + m - 1) // m) * m


def _padded_tile_bytes(rows, cols, itemsize):
    """VMEM footprint of a (rows, cols) buffer after Mosaic tiling/padding.

    Minor dim pads to 128 lanes; second-minor pads to the sublane granularity
    (8 for 32-bit, 16 for 16-bit, 32 for 8-bit).
    """
    sublane = 8 * max(1, 4 // itemsize)
    return _roundup(max(rows, 1), sublane) * _roundup(max(cols, 1), 128) * itemsize


def _vmem_limit_bytes(footprint_bytes):
    # Padded footprint + ~25% headroom + 1 MiB slack, soft-capped well under
    # physical VMEM on every generation our gates allow.
    return min(int(footprint_bytes * 1.25) + (1 << 20), 112 * 1024 * 1024)


def uv_forward(
    U,
    V,
    *,
    tm=512,
    tn=2048,
    out_dtype=jnp.float32,
    max_resident_vmem_bytes=40 * 1024 * 1024,
):
    """X_pred = U @ V.T via a tiled Pallas TPU kernel.

    U: (user_dim, k) float32
    V: (film_dim, k) float32
    returns: (user_dim, film_dim) out_dtype
    """
    M, K = U.shape
    N, K2 = V.shape
    assert K == K2, "U and V must share the latent dimension k"

    in_itemsize = 4  # float32 inputs
    out_itemsize = jnp.dtype(out_dtype).itemsize

    # Pre-transpose V once (outside the kernel) so its VMEM blocks are
    # lane-dense: (K, tn) with the large N axis on the 128-lane minor dim.
    V_T = jnp.transpose(V)  # (K, N)

    # ---- tile selection -------------------------------------------------
    tm = min(tm, M)
    if tm < M:
        tm = max(8, (tm // 8) * 8)
    # v7x has 2 TensorCores: make sure the "parallel" row-block axis has at
    # least 2 programs so one core is not left idle on small user_dim.
    if M > 8:
        two_way = _roundup(pl.cdiv(M, 2), 8)
        if two_way < tm:
            tm = two_way
    tn = min(tn, N)
    if tn < N:
        tn = max(128, (tn // 128) * 128)

    cost = pl.CostEstimate(
        flops=2 * M * N * K,
        bytes_accessed=in_itemsize * (M * K + N * K) + out_itemsize * M * N,
        transcendentals=0,
    )

    # ---- Path A: V^T fully resident in VMEM, grid over row-blocks only ----
    # Output blocks are (tm, N): lane-dense, and V^T is DMA'd from HBM once.
    resident_footprint = (
        2 * _padded_tile_bytes(tm, K, in_itemsize)        # U row-blocks (dbl-buffered)
        + 2 * _padded_tile_bytes(K, N, in_itemsize)       # resident V^T (counted as 2 bufs)
        + 2 * _padded_tile_bytes(tm, N, out_itemsize)     # output row-block (dbl-buffered)
    )
    if resident_footprint <= max_resident_vmem_bytes:
        grid = (pl.cdiv(M, tm),)
        return pl.pallas_call(
            uv_matmul_kernel,
            out_shape=jax.ShapeDtypeStruct((M, N), out_dtype),
            grid_spec=pltpu.PrefetchScalarGridSpec(
                num_scalar_prefetch=0,
                grid=grid,
                in_specs=[
                    pl.BlockSpec((tm, K), lambda i: (i, 0)),   # U row-block
                    pl.BlockSpec((K, N), lambda i: (0, 0)),    # all of V^T, resident
                ],
                out_specs=pl.BlockSpec((tm, N), lambda i: (i, 0)),
            ),
            compiler_params=pltpu.CompilerParams(
                dimension_semantics=("parallel",),
                vmem_limit_bytes=_vmem_limit_bytes(resident_footprint),
            ),
            cost_estimate=cost,
        )(U, V_T)

    # ---- Path B: general 2-D tiling for large film_dim --------------------
    def path_b_footprint(tm_, tn_):
        return (
            2 * _padded_tile_bytes(tm_, K, in_itemsize)
            + 2 * _padded_tile_bytes(K, tn_, in_itemsize)
            + 2 * _padded_tile_bytes(tm_, tn_, out_itemsize)
        )

    # Keep the double-buffered footprint comfortably under scoped VMEM on all
    # generations (v7x physical per-TC VMEM is 64 MiB).
    budget_b = 48 * 1024 * 1024
    while path_b_footprint(tm, tn) > budget_b and (tn > 256 or tm > 16):
        if tn > 256:
            tn = max(256, ((tn // 2) // 128) * 128)
        else:
            tm = max(16, ((tm // 2) // 8) * 8)
    footprint_b = path_b_footprint(tm, tn)

    grid = (pl.cdiv(M, tm), pl.cdiv(N, tn))
    return pl.pallas_call(
        uv_matmul_kernel,
        out_shape=jax.ShapeDtypeStruct((M, N), out_dtype),
        grid_spec=pltpu.PrefetchScalarGridSpec(
            num_scalar_prefetch=0,
            grid=grid,
            in_specs=[
                pl.BlockSpec((tm, K), lambda i, j: (i, 0)),   # U row-block
                pl.BlockSpec((K, tn), lambda i, j: (0, j)),   # V^T column-block (lane-dense)
            ],
            out_specs=pl.BlockSpec((tm, tn), lambda i, j: (i, j)),
        ),
        compiler_params=pltpu.CompilerParams(
            dimension_semantics=("parallel", "parallel"),
            vmem_limit_bytes=_vmem_limit_bytes(footprint_b),
        ),
        cost_estimate=cost,
    )(U, V_T)


if __name__ == "__main__":
    key = jax.random.PRNGKey(0)
    ku, kv, ku2, kv2 = jax.random.split(key, 4)

    # Small shapes consistent with the module: UV(user_dim, film_dim, k).
    user_dim, film_dim, k = 128, 256, 32
    # torch.rand -> uniform [0, 1): mirror that deterministically here.
    U = jax.random.uniform(ku, (user_dim, k), dtype=jnp.float32)
    V = jax.random.uniform(kv, (film_dim, k), dtype=jnp.float32)
    X_ref = U @ V.T

    # Case 1: resident-V^T path (grid over row-blocks, lane-dense output rows).
    X_pred = jax.block_until_ready(uv_forward(U, V))
    assert X_pred.shape == (user_dim, film_dim)
    assert jnp.allclose(X_pred, X_ref, atol=1e-5, rtol=1e-5)

    # Case 2: uneven shapes exercising the cdiv grid + padded/masked last block.
    U2 = jax.random.uniform(ku2, (200, 16), dtype=jnp.float32)
    V2 = jax.random.uniform(kv2, (300, 16), dtype=jnp.float32)
    X2 = jax.block_until_ready(uv_forward(U2, V2, tm=64))
    assert jnp.allclose(X2, U2 @ V2.T, atol=1e-5, rtol=1e-5)

    # Case 3: force the general 2-D tiled path (used when film_dim is large).
    X3 = jax.block_until_ready(uv_forward(U, V, max_resident_vmem_bytes=0))
    assert jnp.allclose(X3, X_ref, atol=1e-5, rtol=1e-5)

    # Case 4: bf16 output (halves the dominant HBM writeback when tolerated).
    Xb = jax.block_until_ready(uv_forward(U, V, out_dtype=jnp.bfloat16))
    assert jnp.allclose(Xb.astype(jnp.float32), X_ref, atol=5e-2, rtol=1e-2)

    print("KERNEL_OK")
</pallas_src>

<mosaic_0001>
module attributes {stable_mosaic.version = 11 : i64} {
  func.func @uv_matmul_kernel(%arg0: i32, %arg1: memref<64x32xf32, #tpu.memory_space<vmem>>, %arg2: memref<32x256xf32, #tpu.memory_space<vmem>>, %arg3: memref<64x256xf32, #tpu.memory_space<vmem>>) attributes {dimension_semantics = [#tpu.dimension_semantics<parallel>], iteration_bounds = array<i64: 2>, scalar_prefetch = 0 : i64, scratch_operands = 0 : i64, tpu.core_type = #tpu.core_type<tc>, window_params = [{transform_indices = @transform_0, window_bounds = array<i64: 64, 32>}, {pipeline_mode = #tpu.pipeline_mode<synchronous>, transform_indices = @transform_1, window_bounds = array<i64: 32, 256>}, {transform_indices = @transform_2, window_bounds = array<i64: 64, 256>}]} {
    %c0 = arith.constant 0 : index
    %c0_0 = arith.constant 0 : index
    %0 = vector.load %arg1[%c0, %c0_0] : memref<64x32xf32, #tpu.memory_space<vmem>>, vector<64x32xf32>
    %c0_1 = arith.constant 0 : index
    %c0_2 = arith.constant 0 : index
    %1 = vector.load %arg2[%c0_1, %c0_2] : memref<32x256xf32, #tpu.memory_space<vmem>>, vector<32x256xf32>
    %cst = arith.constant dense<0.000000e+00> : vector<64x256xf32>
    %2 = tpu.matmul %0, %1, %cst {dimension_numbers = #tpu.dot_dimension_numbers<[1], [0], [0], [1], [0, 0, 1, 1], [], []>} : vector<64x32xf32>, vector<32x256xf32>, vector<64x256xf32> -> vector<64x256xf32>
    %c0_3 = arith.constant 0 : index
    %c0_4 = arith.constant 0 : index
    %3 = vector.load %arg3[%c0_3, %c0_4] : memref<64x256xf32, #tpu.memory_space<vmem>>, vector<64x256xf32>
    tpu.vector_store %arg3[%c0_3, %c0_4], %2 {strides = array<i32>} : memref<64x256xf32, #tpu.memory_space<vmem>>, vector<64x256xf32>,
    return
  }
  func.func @transform_0(%arg0: i32) -> (i32, i32) {
    %c0_i32 = arith.constant 0 : i32
    %c0_i32_0 = arith.constant 0 : i32
    return %arg0, %c0_i32 : i32, i32
  }
  func.func @transform_1(%arg0: i32) -> (i32, i32) {
    %c0_i32 = arith.constant 0 : i32
    %c0_i32_0 = arith.constant 0 : i32
    %c0_i32_1 = arith.constant 0 : i32
    return %c0_i32, %c0_i32_0 : i32, i32
  }
  func.func @transform_2(%arg0: i32) -> (i32, i32) {
    %c0_i32 = arith.constant 0 : i32
    %c0_i32_0 = arith.constant 0 : i32
    return %arg0, %c0_i32 : i32, i32
  }
}

</mosaic_0001>

<llo_original>
// kernel: tpu_custom_call.1
$region0: #{tpu_custom_call.1}
  #allocation0 [shape = 'u32[]', space=smem, size = 0x4, offset = 0x4, fixed_abs, tag = 'smem constant byte address 0x4 - core index']
  #allocation1 [shape = 'u32[144,128]{1,0:T(1,128)}', space=vmem, size = 0x12000, scoped, tag = 'internal scratch']
  %s0 = inlined_call_operand.vmem [shape: f32[128,32], index: 0, kind: input, shape index: {}]
  %s1 = inlined_call_operand.vmem [shape: f32[32,256], index: 1, kind: input, shape index: {}]
  %s2 = inlined_call_operand.hbm [shape: f32[128,256], index: 2, kind: output, shape index: {}]
  %s3 = sld [smem:[#allocation0]]
  $region41: #{tpu_custom_call.1} parent=0
    _
  %s5 = ssub.s32 1, %s3
  %s6 = scalar_select 0, %s5, %s3
  $region1: #{tpu_custom_call.1} parent=0
    #allocation2 [shape = 'u8[131072]{0}', space=vmem, size = 0x20000, scoped, tag = 'output window, operand 0']
    #allocation3 [shape = 's32[2]{0}', space=sflag, size = 0x8, scoped, tag = 'scoped memory for tpu_custom_call.1']
    %7 = vsyncpa [#allocation3], 0
    %s8 = scalar_lea.sflag [#allocation3], 1
    %9 = vsyncpa %s8, 0
    loop: start=0, step=1, limit=4
    $region2: #{tpu_custom_call.1} parent=1 // loop_pre_header
      _
    $region3: #{tpu_custom_call.1} parent=1 // loop_header
      %s11 = sphi 0, %s15
      %p12 = scmp.ge.s32.totalorder %s11, 4
      %s21 = sphi 0, %s23
      %s24 = sphi 0, %s21
      %s25 = sphi 0, %s24
      %s41 = sphi 0, %s25
      %s45 = sphi 0, %s45
      %s47 = sphi 0, %s45
      %s48 = sphi 0, %s47
      %s62 = sphi 0, %s48
      %s68 = sphi 0, %s70
      %s71 = sphi 0, %s68
      %s72 = sphi 0, %s71
      %s88 = sphi 0, %s72
    $region4: #{tpu_custom_call.1} parent=1 // loop_header_branch
      %14 = sbr.rel (%p12) target = $region8
    $region5: #{tpu_custom_call.1} parent=1 // loop_body
      %s16 = ssub.s32 %s11, 1
      %s17 = ssub.s32 %s11, 2
      %s18 = sadd.s32 %s11, 1
      %s19 = ssub.s32 %s11, %s18
      %p20 = scmp.eq.s32.totalorder %s19, 0
      %s22 = sadd.s32 %s21, 1
      %s23 = scalar_select %p20, %s21, %s22
      %p26 = pneg %p20
      %p27 = scmp.eq.s32.totalorder %s11, 1
      %p28 = por %p26, %p27
      %p29 = scmp.ne.s32.totalorder %s21, %s24
      %p30 = scmp.eq.s32.totalorder %s11, 0
      %p31 = por %p29, %p30
      %p32 = scmp.ne.s32.totalorder %s21, %s24
      %p33 = scmp.eq.s32.totalorder %s16, 1
      %p34 = por %p32, %p33
      %p35 = scmp.ne.s32.totalorder %s24, %s25
      %p36 = scmp.eq.s32.totalorder %s16, 0
      %p37 = por %p35, %p36
      %p38 = scmp.ne.s32.totalorder %s24, %s25
      %p39 = scmp.eq.s32.totalorder %s17, 1
      %p40 = por %p38, %p39
      %p42 = scmp.ne.s32.totalorder %s25, %s41
      %p43 = scmp.eq.s32.totalorder %s17, 0
      %p44 = por %p42, %p43
      %s46 = sadd.s32 %s45, 1
      %p49 = scmp.eq.s32.totalorder %s11, 1
      %p50 = scmp.ne.s32.totalorder %s45, %s47
      %p51 = scmp.eq.s32.totalorder %s11, 0
      %p52 = por %p50, %p51
      %p53 = scmp.ne.s32.totalorder %s45, %s47
      %p54 = scmp.eq.s32.totalorder %s16, 1
      %p55 = por %p53, %p54
      %p56 = scmp.ne.s32.totalorder %s47, %s48
      %p57 = scmp.eq.s32.totalorder %s16, 0
      %p58 = por %p56, %p57
      %p59 = scmp.ne.s32.totalorder %s47, %s48
      %p60 = scmp.eq.s32.totalorder %s17, 1
      %p61 = por %p59, %p60
      %p63 = scmp.ne.s32.totalorder %s48, %s62
      %p64 = scmp.eq.s32.totalorder %s17, 0
      %p65 = por %p63, %p64
      %s66 = ssub.s32 %s11, %s18
      %p67 = scmp.eq.s32.totalorder %s66, 0
      %s69 = sadd.s32 %s68, 1
      %s70 = scalar_select %p67, %s68, %s69
      %p73 = pneg %p67
      %p74 = scmp.eq.s32.totalorder %s11, 1
      %p75 = por %p73, %p74
      %p76 = scmp.ne.s32.totalorder %s68, %s71
      %p77 = scmp.eq.s32.totalorder %s11, 0
      %p78 = por %p76, %p77
      %p79 = scmp.ne.s32.totalorder %s68, %s71
      %p80 = scmp.eq.s32.totalorder %s16, 1
      %p81 = por %p79, %p80
      %p82 = scmp.ne.s32.totalorder %s71, %s72
      %p83 = scmp.eq.s32.totalorder %s16, 0
      %p84 = por %p82, %p83
      %p85 = scmp.ne.s32.totalorder %s71, %s72
      %p86 = scmp.eq.s32.totalorder %s17, 1
      %p87 = por %p85, %p86
      %p89 = scmp.ne.s32.totalorder %s72, %s88
      %p90 = scmp.eq.s32.totalorder %s17, 0
      %p91 = por %p89, %p90
      %p92 = scmp.le.s32.totalorder 1, %s11
      %p93 = scmp.lt.s32.totalorder %s11, 3
      %p94 = pnand %p92, %p93
      %p95 = pneg %p94
      // Predicated region
      $region9: #{tpu_custom_call.1} parent=5 // pred_check
        _
      $region10: #{tpu_custom_call.1} parent=5 // pred_check_branch
        %97 = sbr.rel (%p94) target = $region12
      $region11: #{tpu_custom_call.1} parent=5 // pred_region
        %s98 = ssub.s32 %s11, 1
        // Predicated region
        $region13: #{tpu_custom_call.1} parent=11 // pred_check
          %p99 = pneg %p58
        $region14: #{tpu_custom_call.1} parent=11 // pred_check_branch
          %101 = sbr.rel (%p99) target = $region16
        $region15: #{tpu_custom_call.1} parent=11 // pred_region
          _
        $region16: #{tpu_custom_call.1} parent=11 // pred_fallthru
          _
      $region12: #{tpu_custom_call.1} parent=5 // pred_fallthru
        _
      %p102 = scmp.lt.s32.totalorder %s11, 2
      // Predicated region
      $region17: #{tpu_custom_call.1} parent=5 // pred_check
        %p103 = pneg %p102
      $region18: #{tpu_custom_call.1} parent=5 // pred_check_branch
        %105 = sbr.rel (%p103) target = $region20
      $region19: #{tpu_custom_call.1} parent=5 // pred_region
        // Predicated region
        $region21: #{tpu_custom_call.1} parent=19 // pred_check
          %p106 = pneg %p31
        $region22: #{tpu_custom_call.1} parent=19 // pred_check_branch
          %108 = sbr.rel (%p106) target = $region24
        $region23: #{tpu_custom_call.1} parent=19 // pred_region
          %s109 = smul.u32 8, %s11
          %p110 = scmp.lt.s32.totalorder %s109, 15
          %s111 = scalar_select %p110, %s109, 15
          %s112 = smul.addr %s111, 8
          %s113 = scalar_lea.vmem %s0, %s112
          %s114 = smul.u32 8, %s11
        $region24: #{tpu_custom_call.1} parent=19 // pred_fallthru
          _
      $region20: #{tpu_custom_call.1} parent=5 // pred_fallthru
        _
      %p115 = scmp.le.s32.totalorder 1, %s11
      %p116 = scmp.lt.s32.totalorder %s11, 3
      %p117 = pnand %p115, %p116
      %p118 = pneg %p117
      // Predicated region
      $region25: #{tpu_custom_call.1} parent=5 // pred_check
        _
      $region26: #{tpu_custom_call.1} parent=5 // pred_check_branch
        %120 = sbr.rel (%p117) target = $region28
      $region27: #{tpu_custom_call.1} parent=5 // pred_region
        %s121 = ssub.s32 %s11, 1
        %s122 = smul.u32 8, %s16
        %p123 = scmp.lt.s32.totalorder %s122, 15
        %s124 = scalar_select %p123, %s122, 15
        %s125 = smul.addr %s124, 8
        %s126 = scalar_lea.vmem %s0, %s125
        %p127 = pneg %p37
        %p128 = pneg %p34
        %p129 = pneg %p58
        %p130 = pneg %p55
        %p131 = pneg %p84
        %p132 = pneg %p81
        %s133 = sand.u32 %s71, 1
        %s134 = scalar_lea.sflag [#allocation3], %s133
        %s135 = sand.u32 %s71, 1
        %s136 = smul.addr %s135, 128
        %s137 = scalar_lea.vmem [#allocation2], %s136
        %s138 = smul.u32 8, %s16
        %p139 = scmp.lt.s32.totalorder %s138, 15
        %s140 = scalar_select %p139, %s138, 15
        %s141 = smul.addr %s140, 8
        %s142 = scalar_lea.vmem %s0, %s141
        %s143 = smul.u32 8, %s16
        %s144 = smul.u32 8, %s16
        %v145 = vld [vmem:[%s142] sm:$0xff]
        %v146 = vld [vmem:[%s142 + $0x8] sm:$0xff]
        %v147 = vld [vmem:[%s142 + $0x10] sm:$0xff]
        %v148 = vld [vmem:[%s142 + $0x18] sm:$0xff]
        %v149 = vld [vmem:[%s142 + $0x20] sm:$0xff]
        %v150 = vld [vmem:[%s142 + $0x28] sm:$0xff]
        %v151 = vld [vmem:[%s142 + $0x30] sm:$0xff]
        %v152 = vld [vmem:[%s142 + $0x38] sm:$0xff]
        %v153 = vld [vmem:[%s1] sm:$0xff]
        %v154 = vld [vmem:[%s1 + $0x8] sm:$0xff]
        %v155 = vld [vmem:[%s1 + $0x10] sm:$0xff]
        %v156 = vld [vmem:[%s1 + $0x18] sm:$0xff]
        %v157 = vld [vmem:[%s1 + $0x20] sm:$0xff]
        %v158 = vld [vmem:[%s1 + $0x28] sm:$0xff]
        %v159 = vld [vmem:[%s1 + $0x30] sm:$0xff]
        %v160 = vld [vmem:[%s1 + $0x38] sm:$0xff]
        %vm161 = vcmask 261120
        %v163 = vsel %vm161, %v145, 0
        %v166 = vsel %vm161, %v146, 0
        %v169 = vsel %vm161, %v147, 0
        %v172 = vsel %vm161, %v148, 0
        %v175 = vsel %vm161, %v149, 0
        %v178 = vsel %vm161, %v150, 0
        %v181 = vsel %vm161, %v151, 0
        %v184 = vsel %vm161, %v152, 0
        %186 = vmatprep.subr.mxu0 %v154
        %187 = vmatpush1.msra.mxu0 %v153
        %188 = vmatprep.subr.mxu0 %v156
        %189 = vmatpush1.msra.mxu0 %v155
        %190 = vmatprep.subr.mxu0 %v158
        %191 = vmatpush1.msra.mxu0 %v157
        %192 = vmatprep.subr.mxu0 %v160
        %193 = vmatpush1.msra.mxu0 %v159
        %194 = vmatprep.subr.mxu0 0.0
        %195 = vmatpush1.msra.mxu0 0.0
        %196 = vmatprep.subr.mxu0 0.0
        %197 = vmatpush1.msra.mxu0 0.0
        %198 = vmatprep.subr.mxu0 0.0
        %199 = vmatpush1.msra.mxu0 0.0
        %200 = vmatprep.subr.mxu0 0.0
        %201 = vmatpush1.msra.mxu0 0.0
        %202 = vmatprep.subr.mxu0 0.0
        %203 = vmatpush1.msra.mxu0 0.0
        %204 = vmatprep.subr.mxu0 0.0
        %205 = vmatpush1.msra.mxu0 0.0
        %206 = vmatprep.subr.mxu0 0.0
        %207 = vmatpush1.msra.mxu0 0.0
        %208 = vmatprep.subr.mxu0 0.0
        %209 = vmatpush1.msra.mxu0 0.0
        %210 = vmatprep.subr.mxu0 0.0
        %211 = vmatpush1.msra.mxu0 0.0
        %212 = vmatprep.subr.mxu0 0.0
        %213 = vmatpush1.msra.mxu0 0.0
        %214 = vmatprep.subr.mxu0 0.0
        %215 = vmatpush1.msra.mxu0 0.0
        %216 = vmatprep.subr.mxu0 0.0
        %217 = vmatpush1.msra.mxu0 0.0
        %218 = vmatprep.subr.mxu0 0.0
        %219 = vmatpush1.msra.mxu0 0.0
        %220 = vmatprep.subr.mxu0 0.0
        %221 = vmatpush1.msra.mxu0 0.0
        %222 = vmatprep.subr.mxu0 0.0
        %223 = vmatpush1.msra.mxu0 0.0
        %224 = vmatprep.subr.mxu0 0.0
        %225 = vmatpush1.msra.mxu0 0.0
        %226 = vmatprep.subr.mxu0 0.0
        %227 = vmatpush1.msra.mxu0 0.0
        %228 = vmatprep.subr.mxu0 0.0
        %229 = vmatpush1.msra.mxu0 0.0
        %230 = vmatprep.subr.mxu0 0.0
        %231 = vmatpush1.msra.mxu0 0.0
        %232 = vmatprep.subr.mxu0 0.0
        %233 = vmatpush1.msra.mxu0 0.0
        %234 = vmatprep.subr.mxu0 0.0
        %235 = vmatpush1.msra.mxu0 0.0
        %236 = vmatprep.subr.mxu0 0.0
        %237 = vmatpush1.msra.mxu0 0.0
        %238 = vmatprep.subr.mxu0 0.0
        %239 = vmatpush1.msra.mxu0 0.0
        %240 = vmatprep.subr.mxu0 0.0
        %241 = vmatpush1.msra.mxu0 0.0
        %242 = vmatprep.subr.mxu0 0.0
        %243 = vmatpush1.msra.mxu0 0.0
        %244 = vmatprep.subr.mxu0 0.0
        %245 = vmatpush1.msra.mxu0 0.0
        %246 = vmatprep.subr.mxu0 0.0
        %247 = vmatpush1.msra.mxu0 0.0
        %248 = vmatprep.subr.mxu0 0.0
        %249 = vmatpush1.msra.mxu0 0.0
        %250 = vmatprep.mubr.f32.mxu0 0.0
        %251 = vmatmul.mubr.f32.gmra.mrb[0].mxu0 %v163
        %v252 = vpop.f32.mrb[0].mxu0
        %v253 = vadd.f32 0.0, %v252
        %v254 = vpop.f32.mrb[0].mxu0
        %v255 = vadd.f32 0.0, %v254
        %256 = vmatprep.mubr.f32.mxu0 0.0
        %257 = vmatmul.mubr.f32.gmra.mrb[0].mxu0 %v166
        %v258 = vpop.f32.mrb[0].mxu0
        %v259 = vadd.f32 0.0, %v258
        %v260 = vpop.f32.mrb[0].mxu0
        %v261 = vadd.f32 0.0, %v260
        %262 = vmatprep.mubr.f32.mxu0 0.0
        %263 = vmatmul.mubr.f32.gmra.mrb[0].mxu0 %v169
        %v264 = vpop.f32.mrb[0].mxu0
        %v265 = vadd.f32 0.0, %v264
        %v266 = vpop.f32.mrb[0].mxu0
        %v267 = vadd.f32 0.0, %v266
        %268 = vmatprep.mubr.f32.mxu0 0.0
        %269 = vmatmul.mubr.f32.gmra.mrb[0].mxu0 %v172
        %v270 = vpop.f32.mrb[0].mxu0
        %v271 = vadd.f32 0.0, %v270
        %v272 = vpop.f32.mrb[0].mxu0
        %v273 = vadd.f32 0.0, %v272
        %274 = vmatprep.mubr.f32.mxu0 0.0
        %275 = vmatmul.mubr.f32.gmra.mrb[0].mxu0 %v175
        %v276 = vpop.f32.mrb[0].mxu0
        %v277 = vadd.f32 0.0, %v276
        %v278 = vpop.f32.mrb[0].mxu0
        %v279 = vadd.f32 0.0, %v278
        %280 = vmatprep.mubr.f32.mxu0 0.0
        %281 = vmatmul.mubr.f32.gmra.mrb[0].mxu0 %v178
        %v282 = vpop.f32.mrb[0].mxu0
        %v283 = vadd.f32 0.0, %v282
        %v284 = vpop.f32.mrb[0].mxu0
        %v285 = vadd.f32 0.0, %v284
        %286 = vmatprep.mubr.f32.mxu0 0.0
        %287 = vmatmul.mubr.f32.gmra.mrb[0].mxu0 %v181
        %v288 = vpop.f32.mrb[0].mxu0
        %v289 = vadd.f32 0.0, %v288
        %v290 = vpop.f32.mrb[0].mxu0
        %v291 = vadd.f32 0.0, %v290
        %292 = vmatprep.mubr.f32.mxu0 0.0
        %293 = vmatmul.mubr.f32.gmra.mrb[0].mxu0 %v184
        %v294 = vpop.f32.mrb[0].mxu0
        %v295 = vadd.f32 0.0, %v294
        %v296 = vpop.f32.mrb[0].mxu0
        %v297 = vadd.f32 0.0, %v296
        %298 = vdwg.mxu0
        %299 = vst [vmem:[%s137] sm:$0xff] %v253
        %300 = vst [vmem:[%s137 + $0x8] sm:$0xff] %v255
        %301 = vst [vmem:[%s137 + $0x10] sm:$0xff] %v259
        %302 = vst [vmem:[%s137 + $0x18] sm:$0xff] %v261
        %303 = vst [vmem:[%s137 + $0x20] sm:$0xff] %v265
        %304 = vst [vmem:[%s137 + $0x28] sm:$0xff] %v267
        %305 = vst [vmem:[%s137 + $0x30] sm:$0xff] %v271
        %306 = vst [vmem:[%s137 + $0x38] sm:$0xff] %v273
        %307 = vst [vmem:[%s137 + $0x40] sm:$0xff] %v277
        %308 = vst [vmem:[%s137 + $0x48] sm:$0xff] %v279
        %309 = vst [vmem:[%s137 + $0x50] sm:$0xff] %v283
        %310 = vst [vmem:[%s137 + $0x58] sm:$0xff] %v285
        %311 = vst [vmem:[%s137 + $0x60] sm:$0xff] %v289
        %312 = vst [vmem:[%s137 + $0x68] sm:$0xff] %v291
        %313 = vst [vmem:[%s137 + $0x70] sm:$0xff] %v295
        %314 = vst [vmem:[%s137 + $0x78] sm:$0xff] %v297
        %s315 = sand.u32 %s71, 1
        %s316 = scalar_lea.sflag [#allocation3], %s315
        %s317 = sand.u32 %s71, 1
        %s318 = smul.addr %s317, 128
        %s319 = scalar_lea.vmem [#allocation2], %s318
        // Predicated region
        $region29: #{tpu_custom_call.1} parent=27 // pred_check
          %p320 = pneg %p81
        $region30: #{tpu_custom_call.1} parent=27 // pred_check_branch
          %322 = sbr.rel (%p320) target = $region32
        $region31: #{tpu_custom_call.1} parent=27 // pred_region
          %s323 = smul.u32 8, %s16
          %s325 = ssub.s32 2048, 2048
          %326 = vsyncadd %s316, %s325
          %s327 = smul.addr %s323, 2
          %s328 = smul.addr %s327, 128
          %s329 = scalar_lea.hbm %s2, %s328
          %s330 = sshll.u32 %s319, 4
          %s331 = int_to_ptr.vmem [resolvable:$true] %s330
          %336 = dma.vmem_to_hbm [thread:$0]  %s331, 2048, %s329, %s316, 256, 256, 16
        $region32: #{tpu_custom_call.1} parent=27 // pred_fallthru
          _
      $region28: #{tpu_custom_call.1} parent=5 // pred_fallthru
        _
      %p337 = scmp.le.s32.totalorder 2, %s11
      // Predicated region
      $region33: #{tpu_custom_call.1} parent=5 // pred_check
        %p338 = pneg %p337
      $region34: #{tpu_custom_call.1} parent=5 // pred_check_branch
        %340 = sbr.rel (%p338) target = $region36
      $region35: #{tpu_custom_call.1} parent=5 // pred_region
        %s341 = ssub.s32 %s11, 2
        // Predicated region
        $region37: #{tpu_custom_call.1} parent=35 // pred_check
          %p342 = pneg %p87
        $region38: #{tpu_custom_call.1} parent=35 // pred_check_branch
          %344 = sbr.rel (%p342) target = $region40
        $region39: #{tpu_custom_call.1} parent=35 // pred_region
          %s345 = sand.u32 %s72, 1
          %s346 = scalar_lea.sflag [#allocation3], %s345
          %s347 = sand.u32 %s72, 1
          %s348 = smul.addr %s347, 128
          %s349 = scalar_lea.vmem [#allocation2], %s348
          %350 = dma.done %s346, 2048
        $region40: #{tpu_custom_call.1} parent=35 // pred_fallthru
          _
      $region36: #{tpu_custom_call.1} parent=5 // pred_fallthru
        _
    $region6: #{tpu_custom_call.1} parent=1 // loop_footer
      %s15 = sadd.s32 1, %s11
    $region7: #{tpu_custom_call.1} parent=1 // loop_footer_branch
      %10 = sbr.rel target = $region3
    $region8: #{tpu_custom_call.1} parent=1 // loop_exit
      _
    %351 = vsyncpa [#allocation3], 1
    %s352 = scalar_lea.sflag [#allocation3], 1
    %353 = vsyncpa %s352, 1

</llo_original>
